<compile_context>
chip_gen: v7x
topology: tpu7x:2x2x1
jax: 0.10.0
libtpu: 0.0.40
codegen_flags: <defaults>
</compile_context>

<pallas_src>
import math

import jax
import jax.numpy as jnp
from jax.experimental import pallas as pl
from jax.experimental.pallas import tpu as pltpu


def _round_up(x, m):
    return (x + m - 1) // m * m


def _largest_divisor_tile(dim, cap, quantum):
    """Largest multiple of `quantum` that divides `dim` and is <= max(cap, quantum).
    `dim` must itself be a multiple of `quantum`."""
    t = min(max(cap, quantum), dim)
    t = (t // quantum) * quantum
    while dim % t:
        t -= quantum
    return t


# ---------------------------------------------------------------------------
# Kernel: one (tm, tn) output tile = x_tile(tm, K) @ wT_tile(K, tn) + bias(1, tn)
# Whole K contracted in one MXU pass, f32 accumulation, no scratch, no K loop.
# ---------------------------------------------------------------------------
def _linear_kernel(x_ref, w_ref, b_ref, o_ref):
    acc = jnp.dot(x_ref[...], w_ref[...], preferred_element_type=jnp.float32)
    o_ref[...] = (acc + b_ref[...]).astype(o_ref.dtype)


# ---------------------------------------------------------------------------
# One-time parameter preparation (init / update_fc time, NOT per forward call).
# ---------------------------------------------------------------------------
def prepare_head_params(weight, bias=None, *, lane_align=256,
                        param_dtype=jnp.bfloat16):
    """weight (out, in) -> W^T (in, out_padded), bias -> f32 (1, out_padded).

    - Transposed once so the kernel never emits a per-tile weight transpose.
    - out_features zero-padded to a lane_align multiple (256 for v6e/v7x MXU,
      use 128 on v5e) -> lane-dense unmasked stores.
    - Weight cast to bf16 (param_dtype) -> halves the HBM-bound weight stream;
      accumulation stays f32 in the kernel.
    Returns (w_t_padded, bias_padded, out_features)."""
    N, K = weight.shape
    Np = _round_up(N, lane_align)
    w_t = jnp.asarray(weight).T.astype(param_dtype)          # (K, N)
    if Np != N:
        w_t = jnp.pad(w_t, ((0, 0), (0, Np - N)))
    if bias is None:
        b = jnp.zeros((Np,), jnp.float32)
    else:
        b = jnp.asarray(bias).astype(jnp.float32)
        if Np != N:
            b = jnp.pad(b, (0, Np - N))
    return w_t, b.reshape(1, Np), N


# ---------------------------------------------------------------------------
# Forward: F.linear(x, weight, bias) with prepared (transposed/padded/bf16) params.
# ---------------------------------------------------------------------------
def incremental_net_forward(x, w_t_padded, bias_padded, out_features=None, *,
                            tm=None, tn=None, compute_dtype=None, out_dtype=None,
                            vmem_budget_bytes=24 << 20):
    B, K = x.shape
    Kw, Np = w_t_padded.shape
    assert K == Kw, "x in_features must match prepared weight"
    assert bias_padded.shape == (1, Np)
    N = Np if out_features is None else out_features

    orig_dtype = x.dtype
    if out_dtype is None:
        out_dtype = orig_dtype
    if compute_dtype is None:
        compute_dtype = w_t_padded.dtype

    # Cheap per-call work on x only.
    x = x.astype(compute_dtype)
    if w_t_padded.dtype != compute_dtype:          # only if the caller overrides
        w_t_padded = w_t_padded.astype(compute_dtype)

    cs = jnp.dtype(compute_dtype).itemsize
    os_ = jnp.dtype(out_dtype).itemsize
    sub = max(8, 32 // cs)                         # sublane multiple: 8 f32 / 16 bf16
    Bp = _round_up(B, sub)
    if Bp != B:
        x = jnp.pad(x, ((0, Bp - B), (0, 0)))

    # ---- tile sizes -------------------------------------------------------
    # tn: lane-dense, multiple of 128, divides Np.
    tn = _largest_divisor_tile(Np, 512 if tn is None else tn, 128)
    # tm: cover the whole padded batch so the weight is read from HBM exactly once.
    tm = _largest_divisor_tile(Bp, Bp if tm is None else tm, sub)

    def _tile_bytes(tm_, tn_):
        # double-buffered x / W^T / out tiles + bias
        return (2 * tm_ * K * cs + 2 * K * tn_ * cs
                + 2 * tm_ * tn_ * os_ + 2 * tn_ * 4)

    # Shrink tiles (keeping exact divisibility) until the pipelined footprint fits.
    while _tile_bytes(tm, tn) > vmem_budget_bytes and tm > sub:
        tm = _largest_divisor_tile(Bp, tm - sub, sub)
    while _tile_bytes(tm, tn) > vmem_budget_bytes and tn > 128:
        tn = _largest_divisor_tile(Np, tn - 128, 128)

    # v7x has 2 TensorCores: ensure at least 2 blocks along a parallel axis.
    if (Bp // tm) * (Np // tn) < 2:
        if tn > 128:
            tn = _largest_divisor_tile(Np, tn // 2, 128)
        elif tm > sub:
            tm = _largest_divisor_tile(Bp, tm // 2, sub)

    grid_i, grid_j = Bp // tm, Np // tn

    # ---- VMEM limit: 1.5x real footprint, capped at 75% of physical VMEM ---
    vmem_est = _tile_bytes(tm, tn)
    try:
        cap = int(getattr(pltpu.get_tpu_info(), "vmem_capacity_bytes", 64 << 20))
    except Exception:
        cap = 64 << 20
    vmem_limit = int(min(max(int(1.5 * vmem_est), 32 << 20), int(0.75 * cap)))

    cost = pl.CostEstimate(
        flops=2 * Bp * K * Np,
        transcendentals=0,
        bytes_accessed=(grid_j * Bp * K * cs       # x re-read once per class block
                        + grid_i * K * Np * cs     # weight re-read once per batch block
                        + grid_i * Np * 4          # bias
                        + Bp * Np * os_),          # output written once
    )

    out = pl.pallas_call(
        _linear_kernel,
        out_shape=jax.ShapeDtypeStruct((Bp, Np), out_dtype),
        grid_spec=pltpu.PrefetchScalarGridSpec(
            num_scalar_prefetch=0,
            grid=(grid_i, grid_j),
            in_specs=[
                pl.BlockSpec((tm, K), lambda i, j: (i, 0)),    # x tile, full K
                pl.BlockSpec((K, tn), lambda i, j: (0, j)),    # W^T tile, full K
                pl.BlockSpec((1, tn), lambda i, j: (0, j)),    # bias tile (f32)
            ],
            out_specs=pl.BlockSpec((tm, tn), lambda i, j: (i, j)),
        ),
        compiler_params=pltpu.CompilerParams(
            dimension_semantics=("parallel", "parallel"),
            vmem_limit_bytes=vmem_limit,
        ),
        cost_estimate=cost,
    )(x, w_t_padded, bias_padded)

    return out[:B, :N]


# ---------------------------------------------------------------------------
# Parameter init / head growth (plain JAX, host side — matches the nn.Module).
# ---------------------------------------------------------------------------
def init_incremental_net_params(key, in_features, out_features, dtype=jnp.float32):
    """reset_parameters(): kaiming_uniform_(weight, nonlinearity='linear'):
    gain=1, bound = sqrt(3 / fan_in), fan_in = in_features; bias = 0."""
    bound = math.sqrt(3.0 / in_features)
    weight = jax.random.uniform(key, (out_features, in_features), dtype=dtype,
                                minval=-bound, maxval=bound)
    bias = jnp.zeros((out_features,), dtype=dtype)
    return weight, bias


def update_fc(key, weight, bias, nb_classes):
    """IncrementalNet.update_fc(): grow the head, keep old rows, new rows
    kaiming_normal (nonlinearity='linear' -> std = 1/sqrt(fan_in)), new bias = 0.
    Re-run prepare_head_params (one-off) after calling this."""
    out_features, in_features = weight.shape
    std = 1.0 / math.sqrt(in_features)
    new_w = std * jax.random.normal(key, (nb_classes, in_features), dtype=weight.dtype)
    new_w = new_w.at[:out_features].set(weight)
    new_b = jnp.zeros((nb_classes,), dtype=bias.dtype)
    new_b = new_b.at[:out_features].set(bias)
    return new_w, new_b


if __name__ == "__main__":
    key = jax.random.PRNGKey(0)
    k_w, k_x, k_w2, k_x2, k_fc = jax.random.split(key, 5)

    # --- small demo shapes matching the module (linear classifier head) ------
    batch, in_features, out_features = 8, 32, 16
    weight, bias = init_incremental_net_params(k_w, in_features, out_features)
    x = jax.random.normal(k_x, (batch, in_features), dtype=jnp.float32)

    # One-off prep: bf16 weight, transposed, class dim padded to 256.
    w_t_p, b_p, n_out = prepare_head_params(weight, bias)
    y = incremental_net_forward(x, w_t_p, b_p, n_out)
    y = jax.block_until_ready(y)
    assert y.shape == (batch, out_features)
    # Reference with matching numerics (bf16 operands, f32 accumulation).
    x_bf = x.astype(jnp.bfloat16).astype(jnp.float32)
    w_bf = weight.astype(jnp.bfloat16).astype(jnp.float32)
    y_ref = x_bf @ w_bf.T + bias
    assert jnp.allclose(y.astype(jnp.float32), y_ref, atol=2e-2, rtol=2e-2)

    # --- unaligned dims, f32 params: exercises padding / slicing / tile split
    b2, k2, n2 = 20, 300, 200
    w2, bi2 = init_incremental_net_params(k_w2, k2, n2)
    x2 = jax.random.normal(k_x2, (b2, k2), dtype=jnp.float32)
    w2_t_p, b2_p, n2_out = prepare_head_params(w2, bi2, lane_align=128,
                                               param_dtype=jnp.float32)
    y2 = incremental_net_forward(x2, w2_t_p, b2_p, n2_out)
    y2 = jax.block_until_ready(y2)
    y2_ref = x2 @ w2.T + bi2
    assert y2.shape == (b2, n2)
    assert jnp.allclose(y2, y2_ref, atol=1e-4, rtol=1e-4)

    # --- incremental head growth (update_fc) then another forward ------------
    w3, bi3 = update_fc(k_fc, w2, bi2, 260)
    w3_t_p, b3_p, n3_out = prepare_head_params(w3, bi3, lane_align=128,
                                               param_dtype=jnp.float32)
    y3 = incremental_net_forward(x2, w3_t_p, b3_p, n3_out)
    y3 = jax.block_until_ready(y3)
    assert y3.shape == (b2, 260)
    assert jnp.allclose(y3, x2 @ w3.T + bi3, atol=1e-4, rtol=1e-4)

    print("KERNEL_OK")
</pallas_src>

<mosaic_0001>
module attributes {stable_mosaic.version = 11 : i64} {
  func.func @_linear_kernel(%arg0: i32, %arg1: i32, %arg2: memref<16x32xbf16, #tpu.memory_space<vmem>>, %arg3: memref<32x128xbf16, #tpu.memory_space<vmem>>, %arg4: memref<1x128xf32, #tpu.memory_space<vmem>>, %arg5: memref<16x128xf32, #tpu.memory_space<vmem>>) attributes {dimension_semantics = [#tpu.dimension_semantics<parallel>, #tpu.dimension_semantics<parallel>], iteration_bounds = array<i64: 1, 2>, scalar_prefetch = 0 : i64, scratch_operands = 0 : i64, tpu.core_type = #tpu.core_type<tc>, window_params = [{transform_indices = @transform_0, window_bounds = array<i64: 16, 32>}, {transform_indices = @transform_1, window_bounds = array<i64: 32, 128>}, {transform_indices = @transform_2, window_bounds = array<i64: 1, 128>}, {transform_indices = @transform_3, window_bounds = array<i64: 16, 128>}]} {
    %c0 = arith.constant 0 : index
    %c0_0 = arith.constant 0 : index
    %0 = vector.load %arg2[%c0, %c0_0] : memref<16x32xbf16, #tpu.memory_space<vmem>>, vector<16x32xbf16>
    %c0_1 = arith.constant 0 : index
    %c0_2 = arith.constant 0 : index
    %1 = vector.load %arg3[%c0_1, %c0_2] : memref<32x128xbf16, #tpu.memory_space<vmem>>, vector<32x128xbf16>
    %cst = arith.constant dense<0.000000e+00> : vector<16x128xf32>
    %2 = tpu.matmul %0, %1, %cst {dimension_numbers = #tpu.dot_dimension_numbers<[1], [0], [0], [1], [0, 0, 1, 1], [], []>} : vector<16x32xbf16>, vector<32x128xbf16>, vector<16x128xf32> -> vector<16x128xf32>
    %c0_3 = arith.constant 0 : index
    %c0_4 = arith.constant 0 : index
    %3 = vector.load %arg4[%c0_3, %c0_4] : memref<1x128xf32, #tpu.memory_space<vmem>>, vector<1x128xf32>
    %4 = vector.broadcast %3 : vector<1x128xf32> to vector<16x128xf32>
    %5 = arith.addf %2, %4 : vector<16x128xf32>
    %c0_5 = arith.constant 0 : index
    %c0_6 = arith.constant 0 : index
    %6 = vector.load %arg5[%c0_5, %c0_6] : memref<16x128xf32, #tpu.memory_space<vmem>>, vector<16x128xf32>
    tpu.vector_store %arg5[%c0_5, %c0_6], %5 {strides = array<i32>} : memref<16x128xf32, #tpu.memory_space<vmem>>, vector<16x128xf32>,
    return
  }
  func.func @transform_0(%arg0: i32, %arg1: i32) -> (i32, i32) {
    %c0_i32 = arith.constant 0 : i32
    %c0_i32_0 = arith.constant 0 : i32
    return %arg0, %c0_i32 : i32, i32
  }
  func.func @transform_1(%arg0: i32, %arg1: i32) -> (i32, i32) {
    %c0_i32 = arith.constant 0 : i32
    %c0_i32_0 = arith.constant 0 : i32
    return %c0_i32, %arg1 : i32, i32
  }
  func.func @transform_2(%arg0: i32, %arg1: i32) -> (i32, i32) {
    %c0_i32 = arith.constant 0 : i32
    %c0_i32_0 = arith.constant 0 : i32
    return %c0_i32, %arg1 : i32, i32
  }
  func.func @transform_3(%arg0: i32, %arg1: i32) -> (i32, i32) {
    %c0_i32 = arith.constant 0 : i32
    return %arg0, %arg1 : i32, i32
  }
}

</mosaic_0001>

<llo_original>
// kernel: tpu_custom_call.1
$region0: #{tpu_custom_call.1}
  #allocation0 [shape = 'u32[]', space=smem, size = 0x4, offset = 0x4, fixed_abs, tag = 'smem constant byte address 0x4 - core index']
  #allocation1 [shape = 'u32[144,128]{1,0:T(1,128)}', space=vmem, size = 0x12000, scoped, tag = 'internal scratch']
  %s0 = inlined_call_operand.hbm [shape: bf16[16,32], index: 0, kind: input, shape index: {}]
  %s1 = inlined_call_operand.hbm [shape: bf16[32,256], index: 1, kind: input, shape index: {}]
  %s2 = inlined_call_operand.vmem [shape: f32[1,256], index: 2, kind: input, shape index: {}]
  %s3 = inlined_call_operand.hbm [shape: f32[16,256], index: 3, kind: output, shape index: {}]
  %s4 = sld [smem:[#allocation0]]
  $region53: #{tpu_custom_call.1} parent=0
    _
  %s6 = ssub.s32 1, %s4
  %s7 = scalar_select 0, %s6, %s4
  $region1: #{tpu_custom_call.1} parent=0
    #allocation2 [shape = 'u8[4096]{0}', space=vmem, size = 0x1000, scoped, tag = 'input window, operand 0, single buffered']
    #allocation3 [shape = 's32[2]{0}', space=sflag, size = 0x8, scoped, tag = 'scoped memory for tpu_custom_call.1']
    #allocation4 [shape = 's32[2]{0}', space=sflag, size = 0x8, scoped, tag = 'scoped memory for tpu_custom_call.1']
    #allocation5 [shape = 'u8[16384]{0}', space=vmem, size = 0x4000, scoped, tag = 'input window, operand 1']
    #allocation6 [shape = 's32[2]{0}', space=sflag, size = 0x8, scoped, tag = 'scoped memory for tpu_custom_call.1']
    #allocation7 [shape = 'u8[16384]{0}', space=vmem, size = 0x4000, scoped, tag = 'output window, operand 0']
    %8 = vsyncpa [#allocation3], 0
    %9 = vsyncpa [#allocation6], 0
    %s10 = scalar_lea.sflag [#allocation6], 1
    %11 = vsyncpa %s10, 0
    %12 = vsyncpa [#allocation4], 0
    %s13 = scalar_lea.sflag [#allocation4], 1
    %14 = vsyncpa %s13, 0
    loop: start=0, step=1, limit=4
    $region2: #{tpu_custom_call.1} parent=1 // loop_pre_header
      _
    $region3: #{tpu_custom_call.1} parent=1 // loop_header
      %s16 = sphi 0, %s20
      %p17 = scmp.ge.s32.totalorder %s16, 4
      %s23 = sphi 0, %s35
      %s24 = sphi 0, %s31
      %s25 = sphi 0, %s23
      %s26 = sphi 0, %s24
      %s27 = sphi 0, %s25
      %s28 = sphi 0, %s26
      %s38 = sphi 0, %s40
      %s41 = sphi 0, %s38
      %s42 = sphi 0, %s41
      %s58 = sphi 0, %s42
      %s64 = sphi 0, %s66
      %s67 = sphi 0, %s64
      %s68 = sphi 0, %s67
      %s84 = sphi 0, %s68
      %s90 = sphi 0, %s92
      %s93 = sphi 0, %s90
      %s94 = sphi 0, %s93
      %s110 = sphi 0, %s94
      %s118 = sphi 0, %s120
      %s121 = sphi 0, %s118
      %s122 = sphi 0, %s121
      %s138 = sphi 0, %s122
    $region4: #{tpu_custom_call.1} parent=1 // loop_header_branch
      %19 = sbr.rel (%p17) target = $region8
    $region5: #{tpu_custom_call.1} parent=1 // loop_body
      %s21 = ssub.s32 %s16, 1
      %s22 = ssub.s32 %s16, 2
      %s29 = sadd.s32 1, %s24
      %p30 = scmp.ge.s32.totalorder %s29, 2
      %s31 = scalar_select %p30, 0, %s29
      %s32 = sadd.s32 1, %s23
      %s33 = scalar_select %p30, %s32, %s23
      %p34 = scmp.ge.s32.totalorder %s33, 1
      %s35 = scalar_select %p34, 0, %s33
      %s36 = ssub.s32 %s23, %s35
      %p37 = scmp.eq.s32.totalorder %s36, 0
      %s39 = sadd.s32 %s38, 1
      %s40 = scalar_select %p37, %s38, %s39
      %p43 = pneg %p37
      %p44 = scmp.eq.s32.totalorder %s16, 1
      %p45 = por %p43, %p44
      %p46 = scmp.ne.s32.totalorder %s38, %s41
      %p47 = scmp.eq.s32.totalorder %s16, 0
      %p48 = por %p46, %p47
      %p49 = scmp.ne.s32.totalorder %s38, %s41
      %p50 = scmp.eq.s32.totalorder %s21, 1
      %p51 = por %p49, %p50
      %p52 = scmp.ne.s32.totalorder %s41, %s42
      %p53 = scmp.eq.s32.totalorder %s21, 0
      %p54 = por %p52, %p53
      %p55 = scmp.ne.s32.totalorder %s41, %s42
      %p56 = scmp.eq.s32.totalorder %s22, 1
      %p57 = por %p55, %p56
      %p59 = scmp.ne.s32.totalorder %s42, %s58
      %p60 = scmp.eq.s32.totalorder %s22, 0
      %p61 = por %p59, %p60
      %s62 = ssub.s32 %s24, %s31
      %p63 = scmp.eq.s32.totalorder %s62, 0
      %s65 = sadd.s32 %s64, 1
      %s66 = scalar_select %p63, %s64, %s65
      %p69 = pneg %p63
      %p70 = scmp.eq.s32.totalorder %s16, 1
      %p71 = por %p69, %p70
      %p72 = scmp.ne.s32.totalorder %s64, %s67
      %p73 = scmp.eq.s32.totalorder %s16, 0
      %p74 = por %p72, %p73
      %p75 = scmp.ne.s32.totalorder %s64, %s67
      %p76 = scmp.eq.s32.totalorder %s21, 1
      %p77 = por %p75, %p76
      %p78 = scmp.ne.s32.totalorder %s67, %s68
      %p79 = scmp.eq.s32.totalorder %s21, 0
      %p80 = por %p78, %p79
      %p81 = scmp.ne.s32.totalorder %s67, %s68
      %p82 = scmp.eq.s32.totalorder %s22, 1
      %p83 = por %p81, %p82
      %p85 = scmp.ne.s32.totalorder %s68, %s84
      %p86 = scmp.eq.s32.totalorder %s22, 0
      %p87 = por %p85, %p86
      %s88 = ssub.s32 %s24, %s31
      %p89 = scmp.eq.s32.totalorder %s88, 0
      %s91 = sadd.s32 %s90, 1
      %s92 = scalar_select %p89, %s90, %s91
      %p95 = pneg %p89
      %p96 = scmp.eq.s32.totalorder %s16, 1
      %p97 = por %p95, %p96
      %p98 = scmp.ne.s32.totalorder %s90, %s93
      %p99 = scmp.eq.s32.totalorder %s16, 0
      %p100 = por %p98, %p99
      %p101 = scmp.ne.s32.totalorder %s90, %s93
      %p102 = scmp.eq.s32.totalorder %s21, 1
      %p103 = por %p101, %p102
      %p104 = scmp.ne.s32.totalorder %s93, %s94
      %p105 = scmp.eq.s32.totalorder %s21, 0
      %p106 = por %p104, %p105
      %p107 = scmp.ne.s32.totalorder %s93, %s94
      %p108 = scmp.eq.s32.totalorder %s22, 1
      %p109 = por %p107, %p108
      %p111 = scmp.ne.s32.totalorder %s94, %s110
      %p112 = scmp.eq.s32.totalorder %s22, 0
      %p113 = por %p111, %p112
      %s114 = ssub.s32 %s23, %s35
      %s115 = ssub.s32 %s24, %s31
      %s116 = sor.u32 %s114, %s115
      %p117 = scmp.eq.s32.totalorder %s116, 0
      %s119 = sadd.s32 %s118, 1
      %s120 = scalar_select %p117, %s118, %s119
      %p123 = pneg %p117
      %p124 = scmp.eq.s32.totalorder %s16, 1
      %p125 = por %p123, %p124
      %p126 = scmp.ne.s32.totalorder %s118, %s121
      %p127 = scmp.eq.s32.totalorder %s16, 0
      %p128 = por %p126, %p127
      %p129 = scmp.ne.s32.totalorder %s118, %s121
      %p130 = scmp.eq.s32.totalorder %s21, 1
      %p131 = por %p129, %p130
      %p132 = scmp.ne.s32.totalorder %s121, %s122
      %p133 = scmp.eq.s32.totalorder %s21, 0
      %p134 = por %p132, %p133
      %p135 = scmp.ne.s32.totalorder %s121, %s122
      %p136 = scmp.eq.s32.totalorder %s22, 1
      %p137 = por %p135, %p136
      %p139 = scmp.ne.s32.totalorder %s122, %s138
      %p140 = scmp.eq.s32.totalorder %s22, 0
      %p141 = por %p139, %p140
      %p142 = scmp.le.s32.totalorder 1, %s16
      %p143 = scmp.lt.s32.totalorder %s16, 3
      %p144 = pnand %p142, %p143
      %p145 = pneg %p144
      // Predicated region
      $region9: #{tpu_custom_call.1} parent=5 // pred_check
        _
      $region10: #{tpu_custom_call.1} parent=5 // pred_check_branch
        %147 = sbr.rel (%p144) target = $region12
      $region11: #{tpu_custom_call.1} parent=5 // pred_region
        %s148 = ssub.s32 %s16, 1
        // Predicated region
        $region13: #{tpu_custom_call.1} parent=11 // pred_check
          %p149 = pneg %p54
        $region14: #{tpu_custom_call.1} parent=11 // pred_check_branch
          %151 = sbr.rel (%p149) target = $region16
        $region15: #{tpu_custom_call.1} parent=11 // pred_region
          %s152 = smul.u32 2, %s25
          %s154 = ssub.s32 128, 128
          %155 = vsyncadd [#allocation3], %s154
          %s156 = smul.addr %s152, 64
          %s157 = scalar_lea.hbm %s0, %s156
          %s158 = sshll.u32 [#allocation2], 4
          %s159 = int_to_ptr.vmem [resolvable:$true] %s158
          %164 = dma.hbm_to_vmem [thread:$0]  %s157, 128, %s159, [#allocation3], 64, 64, 4
        $region16: #{tpu_custom_call.1} parent=11 // pred_fallthru
          _
      $region12: #{tpu_custom_call.1} parent=5 // pred_fallthru
        _
      %p165 = scmp.lt.s32.totalorder %s16, 2
      // Predicated region
      $region17: #{tpu_custom_call.1} parent=5 // pred_check
        %p166 = pneg %p165
      $region18: #{tpu_custom_call.1} parent=5 // pred_check_branch
        %168 = sbr.rel (%p166) target = $region20
      $region19: #{tpu_custom_call.1} parent=5 // pred_region
        // Predicated region
        $region21: #{tpu_custom_call.1} parent=19 // pred_check
          %p169 = pneg %p74
        $region22: #{tpu_custom_call.1} parent=19 // pred_check_branch
          %171 = sbr.rel (%p169) target = $region24
        $region23: #{tpu_custom_call.1} parent=19 // pred_region
          %s172 = sand.u32 %s64, 1
          %s173 = scalar_lea.sflag [#allocation6], %s172
          %s174 = sand.u32 %s64, 1
          %s175 = smul.addr %s174, 16
          %s176 = scalar_lea.vmem [#allocation5], %s175
          %s178 = ssub.s32 256, 256
          %179 = vsyncadd %s173, %s178
          %s180 = smul.addr %s24, 64
          %s181 = scalar_lea.hbm %s1, %s180
          %s182 = sshll.u32 %s176, 4
          %s183 = int_to_ptr.vmem [resolvable:$true] %s182
          %188 = dma.hbm_to_vmem [thread:$0]  %s181, 256, %s183, %s173, 128, 64, 4
        $region24: #{tpu_custom_call.1} parent=19 // pred_fallthru
          _
        // Predicated region
        $region25: #{tpu_custom_call.1} parent=19 // pred_check
          %p189 = pneg %p100
        $region26: #{tpu_custom_call.1} parent=19 // pred_check_branch
          %191 = sbr.rel (%p189) target = $region28
        $region27: #{tpu_custom_call.1} parent=19 // pred_region
          %p192 = scmp.lt.s32.totalorder %s24, 1
          %s193 = scalar_select %p192, %s24, 1
          %s194 = scalar_lea.vmem %s2, %s193
        $region28: #{tpu_custom_call.1} parent=19 // pred_fallthru
          _
      $region20: #{tpu_custom_call.1} parent=5 // pred_fallthru
        _
      %p195 = scmp.le.s32.totalorder 1, %s16
      %p196 = scmp.lt.s32.totalorder %s16, 3
      %p197 = pnand %p195, %p196
      %p198 = pneg %p197
      // Predicated region
      $region29: #{tpu_custom_call.1} parent=5 // pred_check
        _
      $region30: #{tpu_custom_call.1} parent=5 // pred_check_branch
        %200 = sbr.rel (%p197) target = $region32
      $region31: #{tpu_custom_call.1} parent=5 // pred_region
        %s201 = ssub.s32 %s16, 1
        // Predicated region
        $region33: #{tpu_custom_call.1} parent=31 // pred_check
          %p202 = pneg %p54
        $region34: #{tpu_custom_call.1} parent=31 // pred_check_branch
          %204 = sbr.rel (%p202) target = $region36
        $region35: #{tpu_custom_call.1} parent=31 // pred_region
          %205 = dma.done [#allocation3], 128
        $region36: #{tpu_custom_call.1} parent=31 // pred_fallthru
          _
        %s206 = sand.u32 %s67, 1
        %s207 = scalar_lea.sflag [#allocation6], %s206
        %s208 = sand.u32 %s67, 1
        %s209 = smul.addr %s208, 16
        %s210 = scalar_lea.vmem [#allocation5], %s209
        // Predicated region
        $region37: #{tpu_custom_call.1} parent=31 // pred_check
          %p211 = pneg %p80
        $region38: #{tpu_custom_call.1} parent=31 // pred_check_branch
          %213 = sbr.rel (%p211) target = $region40
        $region39: #{tpu_custom_call.1} parent=31 // pred_region
          %214 = dma.done %s207, 256
        $region40: #{tpu_custom_call.1} parent=31 // pred_fallthru
          _
        %p215 = pneg %p54
        %p216 = pneg %p51
        %s217 = sand.u32 %s67, 1
        %s218 = scalar_lea.sflag [#allocation6], %s217
        %s219 = sand.u32 %s67, 1
        %s220 = smul.addr %s219, 16
        %s221 = scalar_lea.vmem [#allocation5], %s220
        %p222 = pneg %p80
        %p223 = pneg %p77
        %p224 = scmp.lt.s32.totalorder %s26, 1
        %s225 = scalar_select %p224, %s26, 1
        %s226 = scalar_lea.vmem %s2, %s225
        %p227 = pneg %p106
        %p228 = pneg %p103
        %p229 = pneg %p134
        %p230 = pneg %p131
        %s231 = sand.u32 %s121, 1
        %s232 = scalar_lea.sflag [#allocation4], %s231
        %s233 = sand.u32 %s121, 1
        %s234 = smul.addr %s233, 16
        %s235 = scalar_lea.vmem [#allocation7], %s234
        %s236 = smul.u32 2, %s25
        %p237 = scmp.lt.s32.totalorder %s26, 1
        %s238 = scalar_select %p237, %s26, 1
        %s239 = scalar_lea.vmem %s2, %s238
        %s240 = smul.u32 2, %s25
        %v242 = vld [vmem:[#allocation2] sm:$0xf]
        %v243 = vld [vmem:[#allocation2 + $0x4] sm:$0xf]
        %v244 = vld [vmem:[%s210] sm:$0xf]
        %v245 = vld [vmem:[%s210 + $0x4] sm:$0xf]
        %v246 = vld [vmem:[%s210 + $0x8] sm:$0xf]
        %v247 = vld [vmem:[%s210 + $0xc] sm:$0xf]
        %v248 = vld [vmem:[%s239] sm:$0x1]
        %v250 = vlaneseq
        %v251 = vshrl.u32 %v250, 7
        %v252 = vsub.s32 0, %v251
        %v253 = vrot.slane %v248, %v252
        %v257 = vunpack.c.l.b16 %v242
        %v258 = vunpack.c.l.b16 %v243
        %v259 = vpack.c.b16 %v258, %v257
        %v264 = vunpack.c.l.b16 %v244
        %v265 = vunpack.c.l.b16 %v245
        %v266 = vunpack.c.l.b16 %v246
        %v267 = vunpack.c.l.b16 %v247
        %v268 = vpack.c.b16 %v265, %v264
        %v269 = vpack.c.b16 %v267, %v266
        %vm272 = vcmask 261120
        %v274 = vsel %vm272, %v259, 0
        %276 = vmatprep.subr.bf16.mxu0 0
        %277 = vmatpush1.bf16.msra.mxu0 %v268
        %278 = vmatprep.subr.bf16.mxu0 0
        %279 = vmatpush1.bf16.msra.mxu0 %v269
        %280 = vmatprep.subr.bf16.mxu0 0
        %281 = vmatpush1.bf16.msra.mxu0 0
        %282 = vmatprep.subr.bf16.mxu0 0
        %283 = vmatpush1.bf16.msra.mxu0 0
        %284 = vmatprep.subr.bf16.mxu0 0
        %285 = vmatpush1.bf16.msra.mxu0 0
        %286 = vmatprep.subr.bf16.mxu0 0
        %287 = vmatpush1.bf16.msra.mxu0 0
        %288 = vmatprep.subr.bf16.mxu0 0
        %289 = vmatpush1.bf16.msra.mxu0 0
        %290 = vmatprep.subr.bf16.mxu0 0
        %291 = vmatpush1.bf16.msra.mxu0 0
        %292 = vmatprep.subr.bf16.mxu0 0
        %293 = vmatpush1.bf16.msra.mxu0 0
        %294 = vmatprep.subr.bf16.mxu0 0
        %295 = vmatpush1.bf16.msra.mxu0 0
        %296 = vmatprep.subr.bf16.mxu0 0
        %297 = vmatpush1.bf16.msra.mxu0 0
        %298 = vmatprep.subr.bf16.mxu0 0
        %299 = vmatpush1.bf16.msra.mxu0 0
        %300 = vmatprep.subr.bf16.mxu0 0
        %301 = vmatpush1.bf16.msra.mxu0 0
        %302 = vmatprep.subr.bf16.mxu0 0
        %303 = vmatpush1.bf16.msra.mxu0 0
        %304 = vmatprep.subr.bf16.mxu0 0
        %305 = vmatpush1.bf16.msra.mxu0 0
        %306 = vmatprep.subr.bf16.mxu0 0
        %307 = vmatpush1.bf16.msra.mxu0 0
        %308 = vmatprep.mubr.bf16.mxu0 0
        %309 = vmatmul.mubr.bf16.gmra.mrb[0].mxu0 %v274
        %v310 = vpop.f32.mrb[0].mxu0
        %v311 = vadd.f32 %v253, %v310
        %v312 = vpop.f32.mrb[0].mxu0
        %v313 = vpop.f32.mrb[0].mxu0
        %v314 = vadd.f32 %v253, %v313
        %v315 = vpop.f32.mrb[0].mxu0
        %316 = vdwg.mxu0
        %317 = vst [vmem:[%s235] sm:$0xff] %v311
        %318 = vst [vmem:[%s235 + $0x8] sm:$0xff] %v314
        %s319 = sand.u32 %s121, 1
        %s320 = scalar_lea.sflag [#allocation4], %s319
        %s321 = sand.u32 %s121, 1
        %s322 = smul.addr %s321, 16
        %s323 = scalar_lea.vmem [#allocation7], %s322
        // Predicated region
        $region41: #{tpu_custom_call.1} parent=31 // pred_check
          %p324 = pneg %p131
        $region42: #{tpu_custom_call.1} parent=31 // pred_check_branch
          %326 = sbr.rel (%p324) target = $region44
        $region43: #{tpu_custom_call.1} parent=31 // pred_region
          %s327 = smul.u32 2, %s25
          %s329 = ssub.s32 256, 256
          %330 = vsyncadd %s320, %s329
          %s331 = smul.addr %s327, 2
          %s332 = sadd.s32 %s26, %s331
          %s333 = smul.addr %s332, 128
          %s334 = scalar_lea.hbm %s3, %s333
          %s335 = sshll.u32 %s323, 4
          %s336 = int_to_ptr.vmem [resolvable:$true] %s335
          %341 = dma.vmem_to_hbm [thread:$0]  %s336, 256, %s334, %s320, 128, 256, 8
        $region44: #{tpu_custom_call.1} parent=31 // pred_fallthru
          _
      $region32: #{tpu_custom_call.1} parent=5 // pred_fallthru
        _
      %p342 = scmp.le.s32.totalorder 2, %s16
      // Predicated region
      $region45: #{tpu_custom_call.1} parent=5 // pred_check
        %p343 = pneg %p342
      $region46: #{tpu_custom_call.1} parent=5 // pred_check_branch
        %345 = sbr.rel (%p343) target = $region48
      $region47: #{tpu_custom_call.1} parent=5 // pred_region
        %s346 = ssub.s32 %s16, 2
        // Predicated region
        $region49: #{tpu_custom_call.1} parent=47 // pred_check
          %p347 = pneg %p137
        $region50: #{tpu_custom_call.1} parent=47 // pred_check_branch
          %349 = sbr.rel (%p347) target = $region52
        $region51: #{tpu_custom_call.1} parent=47 // pred_region
          %s350 = sand.u32 %s122, 1
          %s351 = scalar_lea.sflag [#allocation4], %s350
          %s352 = sand.u32 %s122, 1
          %s353 = smul.addr %s352, 16
          %s354 = scalar_lea.vmem [#allocation7], %s353
          %355 = dma.done %s351, 256
        $region52: #{tpu_custom_call.1} parent=47 // pred_fallthru
          _
      $region48: #{tpu_custom_call.1} parent=5 // pred_fallthru
        _
    $region6: #{tpu_custom_call.1} parent=1 // loop_footer
      %s20 = sadd.s32 1, %s16
    $region7: #{tpu_custom_call.1} parent=1 // loop_footer_branch
      %15 = sbr.rel target = $region3
    $region8: #{tpu_custom_call.1} parent=1 // loop_exit
      _
    %356 = vsyncpa [#allocation3], 1
    %s357 = scalar_lea.sflag [#allocation3], 1
    %358 = vsyncpa %s357, 1
    %359 = vsyncpa [#allocation6], 1
    %s360 = scalar_lea.sflag [#allocation6], 1
    %361 = vsyncpa %s360, 1
    %362 = vsyncpa [#allocation4], 1
    %s363 = scalar_lea.sflag [#allocation4], 1
    %364 = vsyncpa %s363, 1

</llo_original>
